<compile_context>
chip_gen: v7x
topology: tpu7x:2x2x1
jax: 0.10.0
libtpu: 0.0.40
codegen_flags: <defaults>
</compile_context>

<pallas_src>
import functools

import jax
import jax.numpy as jnp
from jax.experimental import pallas as pl
from jax.experimental.pallas import tpu as pltpu


def _round_up(a: int, b: int) -> int:
    return ((a + b - 1) // b) * b


def _cdiv(a: int, b: int) -> int:
    return (a + b - 1) // b


def _unembed_kernel(x_ref, w_ref, o_ref):
    # One output tile; full d_model contraction in a single MXU call,
    # f32 accumulation regardless of input / output dtype.
    o_ref[...] = jnp.dot(
        x_ref[...], w_ref[...], preferred_element_type=jnp.float32
    ).astype(o_ref.dtype)


def _vmem_budget_bytes() -> int:
    """~60% of physical VMEM (per TensorCore), conservative fallback 64 MiB."""
    cap = 64 * 1024 * 1024  # v7x per-TC physical; safe lower bound everywhere
    try:
        cap = int(getattr(pltpu.get_tpu_info(), "vmem_capacity_bytes", cap))
    except Exception:
        pass
    return int(min(cap * 0.6, 96 * 1024 * 1024))


@functools.partial(
    jax.jit,
    static_argnames=("tm", "tn", "compute_dtype", "out_dtype", "x_resident"),
)
def unembed(x, w_u, *, tm=None, tn=None, compute_dtype=None, out_dtype=None,
            x_resident=None):
    """Unembed.forward: x @ W_U (b_U is unused in the module's forward).

    x:   [batch, position, d_model]
    w_u: [d_model, d_vocab]
    out: [batch, position, d_vocab]  (dtype = out_dtype or x.dtype)

    compute_dtype defaults to w_u.dtype: pre-cast W_U to bf16 OUTSIDE the jit
    for the fast path (halved W/x HBM streams, native bf16 MXU, f32 accum).
    """
    batch, posn, d_model = x.shape
    d_model_w, d_vocab = w_u.shape
    assert d_model == d_model_w
    M, K, V = batch * posn, d_model, d_vocab

    out_dt = jnp.dtype(out_dtype) if out_dtype is not None else jnp.dtype(x.dtype)
    cdt = jnp.dtype(compute_dtype) if compute_dtype is not None else jnp.dtype(w_u.dtype)

    x2d = x.reshape(M, K)
    if x2d.dtype != cdt:
        x2d = x2d.astype(cdt)
    if w_u.dtype != cdt:
        # NOTE: for production, pre-cast W_U once at parameter creation instead
        # of paying this full-array cast every call.
        w_u = w_u.astype(cdt)

    in_item = cdt.itemsize
    out_item = out_dt.itemsize
    budget = _vmem_budget_bytes()

    # ---------------- tile selection (trace-time Python) ----------------
    if tn is None:
        tn = 4096 if in_item <= 2 else 2048
    tn = max(128, min(_round_up(tn, 128), _round_up(V, 128)))

    def resident_ws(tn_):
        # x (kept resident) + double-buffered W tile + double-buffered out tile
        return 2 * (M * K + K * tn_) * in_item + 2 * M * tn_ * out_item

    if x_resident is None:
        x_resident = resident_ws(tn) <= budget
    if x_resident:
        while resident_ws(tn) > budget and tn > 512:
            tn = max(512, _round_up(tn // 2, 128))
        if resident_ws(tn) > budget and x_resident is not True:
            x_resident = False

    if x_resident:
        # Vocab-only grid: x DMA'd from HBM once, each W_U tile once.
        grid = (_cdiv(V, tn),)
        in_specs = [
            pl.BlockSpec((M, K), lambda v: (0, 0)),
            pl.BlockSpec((K, tn), lambda v: (0, v)),
        ]
        out_spec = pl.BlockSpec((M, tn), lambda v: (0, v))
        semantics = ("parallel",)
    else:
        if tm is None:
            if M <= 256:
                tm = _round_up(max(M, 8), 8)
            else:
                # Minimize wasted rows in the final (ragged) row tile.
                n_m = _cdiv(M, 256)
                tm = _round_up(_cdiv(M, n_m), 8)
        else:
            tm = max(8, _round_up(min(tm, _round_up(M, 8)), 8))

        def tiled_ws(tm_, tn_):
            return 2 * (tm_ * K + K * tn_) * in_item + 2 * tm_ * tn_ * out_item

        while tiled_ws(tm, tn) > budget and tn > 512:
            tn = max(512, _round_up(tn // 2, 128))
        while tiled_ws(tm, tn) > budget and tm > 64:
            tm = max(64, _round_up(tm // 2, 8))
        # TODO(synk): for very large d_model (>= ~4096) reintroduce a K grid
        # axis ("arbitrary") with an f32 VMEM accumulator instead of shrinking
        # tn, to stay within v7x's 64 MiB VMEM.

        # Vocab axis outermost: W_U (the dominant HBM stream) is DMA'd from
        # HBM exactly once; it is also the leading "parallel" axis for 2-TC
        # chips. Large tn keeps the number of x re-stream passes small.
        grid = (_cdiv(V, tn), _cdiv(M, tm))
        in_specs = [
            pl.BlockSpec((tm, K), lambda v, m: (m, 0)),
            pl.BlockSpec((K, tn), lambda v, m: (0, v)),
        ]
        out_spec = pl.BlockSpec((tm, tn), lambda v, m: (m, v))
        semantics = ("parallel", "parallel")

    cost = pl.CostEstimate(
        flops=2 * M * K * V,
        transcendentals=0,
        bytes_accessed=(M * K + K * V) * in_item + M * V * out_item,
    )

    out2d = pl.pallas_call(
        _unembed_kernel,
        out_shape=jax.ShapeDtypeStruct((M, V), out_dt),
        grid=grid,
        in_specs=in_specs,
        out_specs=out_spec,
        compiler_params=pltpu.CompilerParams(
            dimension_semantics=semantics,
            vmem_limit_bytes=int(budget),
        ),
        cost_estimate=cost,
    )(x2d, w_u)

    return out2d.reshape(batch, posn, d_vocab)


if __name__ == "__main__":
    key = jax.random.PRNGKey(0)
    init_range = 0.02
    k1, k2, k3, k4 = jax.random.split(key, 4)

    # Case 1: tile-friendly shapes -> resident-x path (vocab-only grid).
    b, p, dm, dv = 2, 8, 128, 256
    x = jax.random.normal(k1, (b, p, dm), dtype=jnp.float32)
    W_U = init_range * jax.random.normal(k2, (dm, dv), dtype=jnp.float32)
    # b_U exists in the module but is unused in forward(); omitted from compute.
    out = jax.block_until_ready(unembed(x, W_U))
    ref = jnp.einsum("bpd,dv->bpv", x, W_U)
    assert out.shape == (b, p, dv)
    assert jnp.allclose(out, ref, atol=1e-4, rtol=1e-4)

    # Case 2: ragged shapes (M=14 rows, d_vocab=250, like 50257) — exercises
    # Pallas edge-block masking; no host-side pad or output slice anywhere.
    b2, p2, dm2, dv2 = 2, 7, 128, 250
    x2 = jax.random.normal(k3, (b2, p2, dm2), dtype=jnp.float32)
    W2 = init_range * jax.random.normal(k4, (dm2, dv2), dtype=jnp.float32)
    out2 = jax.block_until_ready(unembed(x2, W2))
    ref2 = jnp.einsum("bpd,dv->bpv", x2, W2)
    assert out2.shape == (b2, p2, dv2)
    assert jnp.allclose(out2, ref2, atol=1e-4, rtol=1e-4)

    # Case 3: forced streaming/tiled path with a multi-tile grid and a ragged
    # row edge (M=120, tm=32 -> 4 row tiles, last one partially masked).
    b3, p3, dm3, dv3 = 3, 40, 128, 384
    x3 = jax.random.normal(k1, (b3, p3, dm3), dtype=jnp.float32)
    W3 = init_range * jax.random.normal(k2, (dm3, dv3), dtype=jnp.float32)
    out3 = jax.block_until_ready(
        unembed(x3, W3, tm=32, tn=128, x_resident=False))
    ref3 = jnp.einsum("bpd,dv->bpv", x3, W3)
    assert out3.shape == (b3, p3, dv3)
    assert jnp.allclose(out3, ref3, atol=1e-4, rtol=1e-4)

    # Case 4: bf16 compute path (halved W/x HBM streams, native bf16 MXU,
    # f32 accumulation; output stays f32).
    out_bf16 = jax.block_until_ready(unembed(x, W_U, compute_dtype=jnp.bfloat16))
    assert jnp.allclose(out_bf16, ref, atol=2e-2, rtol=2e-2)

    print("KERNEL_OK")
</pallas_src>

<mosaic_0001>
module attributes {stable_mosaic.version = 11 : i64} {
  func.func @_unembed_kernel(%arg0: i32, %arg1: memref<16x128xf32, #tpu.memory_space<vmem>>, %arg2: memref<128x256xf32, #tpu.memory_space<vmem>>, %arg3: memref<16x256xf32, #tpu.memory_space<vmem>>) attributes {dimension_semantics = [#tpu.dimension_semantics<parallel>], iteration_bounds = array<i64: 1>, scalar_prefetch = 0 : i64, scratch_operands = 0 : i64, tpu.core_type = #tpu.core_type<tc>, window_params = [{pipeline_mode = #tpu.pipeline_mode<synchronous>, transform_indices = @transform_0, window_bounds = array<i64: 16, 128>}, {transform_indices = @transform_1, window_bounds = array<i64: 128, 256>}, {transform_indices = @transform_2, window_bounds = array<i64: 16, 256>}]} {
    %c0 = arith.constant 0 : index
    %c0_0 = arith.constant 0 : index
    %0 = vector.load %arg1[%c0, %c0_0] : memref<16x128xf32, #tpu.memory_space<vmem>>, vector<16x128xf32>
    %c0_1 = arith.constant 0 : index
    %c0_2 = arith.constant 0 : index
    %1 = vector.load %arg2[%c0_1, %c0_2] : memref<128x256xf32, #tpu.memory_space<vmem>>, vector<128x256xf32>
    %cst = arith.constant dense<0.000000e+00> : vector<16x256xf32>
    %2 = tpu.matmul %0, %1, %cst {dimension_numbers = #tpu.dot_dimension_numbers<[1], [0], [0], [1], [0, 0, 1, 1], [], []>} : vector<16x128xf32>, vector<128x256xf32>, vector<16x256xf32> -> vector<16x256xf32>
    %c0_3 = arith.constant 0 : index
    %c0_4 = arith.constant 0 : index
    %3 = vector.load %arg3[%c0_3, %c0_4] : memref<16x256xf32, #tpu.memory_space<vmem>>, vector<16x256xf32>
    tpu.vector_store %arg3[%c0_3, %c0_4], %2 {strides = array<i32>} : memref<16x256xf32, #tpu.memory_space<vmem>>, vector<16x256xf32>,
    return
  }
  func.func @transform_0(%arg0: i32) -> (i32, i32) {
    %c0_i32 = arith.constant 0 : i32
    %c0_i32_0 = arith.constant 0 : i32
    %c0_i32_1 = arith.constant 0 : i32
    return %c0_i32, %c0_i32_0 : i32, i32
  }
  func.func @transform_1(%arg0: i32) -> (i32, i32) {
    %c0_i32 = arith.constant 0 : i32
    %c0_i32_0 = arith.constant 0 : i32
    return %c0_i32, %arg0 : i32, i32
  }
  func.func @transform_2(%arg0: i32) -> (i32, i32) {
    %c0_i32 = arith.constant 0 : i32
    %c0_i32_0 = arith.constant 0 : i32
    return %c0_i32, %arg0 : i32, i32
  }
}

</mosaic_0001>

<llo_original>
// kernel: unembed.1
$region0: #{unembed.1}
  #allocation0 [shape = 'u32[]', space=smem, size = 0x4, offset = 0x4, fixed_abs, tag = 'smem constant byte address 0x4 - core index']
  #allocation1 [shape = 'u32[144,128]{1,0:T(1,128)}', space=vmem, size = 0x12000, scoped, tag = 'internal scratch']
  %s0 = inlined_call_operand.hbm [shape: f32[16,128], index: 0, kind: input, shape index: {}]
  %s1 = inlined_call_operand.hbm [shape: f32[128,256], index: 1, kind: input, shape index: {}]
  %s2 = inlined_call_operand.hbm [shape: f32[16,256], index: 2, kind: output, shape index: {}]
  %s3 = sld [smem:[#allocation0]]
  $region26: #{unembed.1} parent=0
    _
  %s5 = ssub.s32 1, %s3
  %s6 = scalar_select 0, %s5, %s3
  $region1: #{unembed.1} parent=0
    #allocation2 [shape = 'u8[8192]{0}', space=vmem, size = 0x2000, scoped, tag = 'input window, operand 0, single buffered']
    #allocation3 [shape = 's32[1]{0}', space=sflag, size = 0x4, scoped, tag = 'scoped memory for unembed.1']
    #allocation4 [shape = 's32[1]{0}', space=sflag, size = 0x4, scoped, tag = 'scoped memory for unembed.1']
    #allocation5 [shape = 'u8[131072]{0}', space=vmem, size = 0x20000, scoped, tag = 'input window, operand 1, single buffered']
    #allocation6 [shape = 's32[1]{0}', space=sflag, size = 0x4, scoped, tag = 'scoped memory for unembed.1']
    #allocation7 [shape = 'u8[16384]{0}', space=vmem, size = 0x4000, scoped, tag = 'output window, operand 0, single buffered']
    %7 = vsyncpa [#allocation3], 0
    %8 = vsyncpa [#allocation6], 0
    %9 = vsyncpa [#allocation4], 0
    // Predicated region
    $region2: #{unembed.1} parent=1 // pred_check
      _
    $region3: #{unembed.1} parent=1 // pred_check_branch
      %11 = sbr.rel (0) target = $region5
    $region4: #{unembed.1} parent=1 // pred_region
      %s13 = ssub.s32 256, 256
      %14 = vsyncadd [#allocation3], %s13
      %s15 = sshll.u32 [#allocation2], 4
      %s16 = int_to_ptr.vmem [resolvable:$true] %s15
      %21 = dma.hbm_to_vmem [thread:$0]  %s0, 256, %s16, [#allocation3], 128, 128, 8
    $region5: #{unembed.1} parent=1 // pred_fallthru
      _
    // Predicated region
    $region6: #{unembed.1} parent=1 // pred_check
      _
    $region7: #{unembed.1} parent=1 // pred_check_branch
      %23 = sbr.rel (0) target = $region9
    $region8: #{unembed.1} parent=1 // pred_region
      %s25 = ssub.s32 4096, 4096
      %26 = vsyncadd [#allocation6], %s25
      %s27 = sshll.u32 [#allocation5], 4
      %s28 = int_to_ptr.vmem [resolvable:$true] %s27
      %33 = dma.hbm_to_vmem [thread:$0]  %s1, 4096, %s28, [#allocation6], 256, 256, 16
    $region9: #{unembed.1} parent=1 // pred_fallthru
      _
    // Predicated region
    $region10: #{unembed.1} parent=1 // pred_check
      _
    $region11: #{unembed.1} parent=1 // pred_check_branch
      %35 = sbr.rel (0) target = $region13
    $region12: #{unembed.1} parent=1 // pred_region
      %36 = dma.done [#allocation3], 256
    $region13: #{unembed.1} parent=1 // pred_fallthru
      _
    // Predicated region
    $region14: #{unembed.1} parent=1 // pred_check
      _
    $region15: #{unembed.1} parent=1 // pred_check_branch
      %38 = sbr.rel (0) target = $region17
    $region16: #{unembed.1} parent=1 // pred_region
      %39 = dma.done [#allocation6], 4096
    $region17: #{unembed.1} parent=1 // pred_fallthru
      _
    %v40 = vld [vmem:[#allocation2] sm:$0xff]
    %v41 = vld [vmem:[#allocation2 + $0x8] sm:$0xff]
    %v42 = vld [vmem:[#allocation5] sm:$0xff]
    %v43 = vld [vmem:[#allocation5 + $0x8] sm:$0xff]
    %v44 = vld [vmem:[#allocation5 + $0x10] sm:$0xff]
    %v45 = vld [vmem:[#allocation5 + $0x18] sm:$0xff]
    %v46 = vld [vmem:[#allocation5 + $0x20] sm:$0xff]
    %v47 = vld [vmem:[#allocation5 + $0x28] sm:$0xff]
    %v48 = vld [vmem:[#allocation5 + $0x30] sm:$0xff]
    %v49 = vld [vmem:[#allocation5 + $0x38] sm:$0xff]
    %v50 = vld [vmem:[#allocation5 + $0x40] sm:$0xff]
    %v51 = vld [vmem:[#allocation5 + $0x48] sm:$0xff]
    %v52 = vld [vmem:[#allocation5 + $0x50] sm:$0xff]
    %v53 = vld [vmem:[#allocation5 + $0x58] sm:$0xff]
    %v54 = vld [vmem:[#allocation5 + $0x60] sm:$0xff]
    %v55 = vld [vmem:[#allocation5 + $0x68] sm:$0xff]
    %v56 = vld [vmem:[#allocation5 + $0x70] sm:$0xff]
    %v57 = vld [vmem:[#allocation5 + $0x78] sm:$0xff]
    %v58 = vld [vmem:[#allocation5 + $0x80] sm:$0xff]
    %v59 = vld [vmem:[#allocation5 + $0x88] sm:$0xff]
    %v60 = vld [vmem:[#allocation5 + $0x90] sm:$0xff]
    %v61 = vld [vmem:[#allocation5 + $0x98] sm:$0xff]
    %v62 = vld [vmem:[#allocation5 + $0xa0] sm:$0xff]
    %v63 = vld [vmem:[#allocation5 + $0xa8] sm:$0xff]
    %v64 = vld [vmem:[#allocation5 + $0xb0] sm:$0xff]
    %v65 = vld [vmem:[#allocation5 + $0xb8] sm:$0xff]
    %v66 = vld [vmem:[#allocation5 + $0xc0] sm:$0xff]
    %v67 = vld [vmem:[#allocation5 + $0xc8] sm:$0xff]
    %v68 = vld [vmem:[#allocation5 + $0xd0] sm:$0xff]
    %v69 = vld [vmem:[#allocation5 + $0xd8] sm:$0xff]
    %v70 = vld [vmem:[#allocation5 + $0xe0] sm:$0xff]
    %v71 = vld [vmem:[#allocation5 + $0xe8] sm:$0xff]
    %v72 = vld [vmem:[#allocation5 + $0xf0] sm:$0xff]
    %v73 = vld [vmem:[#allocation5 + $0xf8] sm:$0xff]
    %74 = vmatprep.subr.mxu0 %v43
    %75 = vmatpush1.msra.mxu0 %v42
    %76 = vmatprep.subr.mxu0 %v45
    %77 = vmatpush1.msra.mxu0 %v44
    %78 = vmatprep.subr.mxu0 %v47
    %79 = vmatpush1.msra.mxu0 %v46
    %80 = vmatprep.subr.mxu0 %v49
    %81 = vmatpush1.msra.mxu0 %v48
    %82 = vmatprep.subr.mxu0 %v51
    %83 = vmatpush1.msra.mxu0 %v50
    %84 = vmatprep.subr.mxu0 %v53
    %85 = vmatpush1.msra.mxu0 %v52
    %86 = vmatprep.subr.mxu0 %v55
    %87 = vmatpush1.msra.mxu0 %v54
    %88 = vmatprep.subr.mxu0 %v57
    %89 = vmatpush1.msra.mxu0 %v56
    %90 = vmatprep.subr.mxu0 %v59
    %91 = vmatpush1.msra.mxu0 %v58
    %92 = vmatprep.subr.mxu0 %v61
    %93 = vmatpush1.msra.mxu0 %v60
    %94 = vmatprep.subr.mxu0 %v63
    %95 = vmatpush1.msra.mxu0 %v62
    %96 = vmatprep.subr.mxu0 %v65
    %97 = vmatpush1.msra.mxu0 %v64
    %98 = vmatprep.subr.mxu0 %v67
    %99 = vmatpush1.msra.mxu0 %v66
    %100 = vmatprep.subr.mxu0 %v69
    %101 = vmatpush1.msra.mxu0 %v68
    %102 = vmatprep.subr.mxu0 %v71
    %103 = vmatpush1.msra.mxu0 %v70
    %104 = vmatprep.subr.mxu0 %v73
    %105 = vmatpush1.msra.mxu0 %v72
    %106 = vmatprep.subr.mxu0 0.0
    %107 = vmatpush1.msra.mxu0 0.0
    %108 = vmatprep.subr.mxu0 0.0
    %109 = vmatpush1.msra.mxu0 0.0
    %110 = vmatprep.subr.mxu0 0.0
    %111 = vmatpush1.msra.mxu0 0.0
    %112 = vmatprep.subr.mxu0 0.0
    %113 = vmatpush1.msra.mxu0 0.0
    %114 = vmatprep.subr.mxu0 0.0
    %115 = vmatpush1.msra.mxu0 0.0
    %116 = vmatprep.subr.mxu0 0.0
    %117 = vmatpush1.msra.mxu0 0.0
    %118 = vmatprep.subr.mxu0 0.0
    %119 = vmatpush1.msra.mxu0 0.0
    %120 = vmatprep.subr.mxu0 0.0
    %121 = vmatpush1.msra.mxu0 0.0
    %122 = vmatprep.subr.mxu0 0.0
    %123 = vmatpush1.msra.mxu0 0.0
    %124 = vmatprep.subr.mxu0 0.0
    %125 = vmatpush1.msra.mxu0 0.0
    %126 = vmatprep.subr.mxu0 0.0
    %127 = vmatpush1.msra.mxu0 0.0
    %128 = vmatprep.subr.mxu0 0.0
    %129 = vmatpush1.msra.mxu0 0.0
    %130 = vmatprep.subr.mxu0 0.0
    %131 = vmatpush1.msra.mxu0 0.0
    %132 = vmatprep.subr.mxu0 0.0
    %133 = vmatpush1.msra.mxu0 0.0
    %134 = vmatprep.subr.mxu0 0.0
    %135 = vmatpush1.msra.mxu0 0.0
    %136 = vmatprep.subr.mxu0 0.0
    %137 = vmatpush1.msra.mxu0 0.0
    %138 = vmatprep.mubr.f32.mxu0 0.0
    %139 = vmatmul.mubr.f32.gmra.mrb[0].mxu0 %v40
    %v140 = vpop.f32.mrb[0].mxu0
    %v141 = vadd.f32 0.0, %v140
    %v142 = vpop.f32.mrb[0].mxu0
    %v143 = vadd.f32 0.0, %v142
    %144 = vmatprep.mubr.f32.mxu0 0.0
    %145 = vmatmul.mubr.f32.gmra.mrb[0].mxu0 %v41
    %v146 = vpop.f32.mrb[0].mxu0
    %v147 = vadd.f32 0.0, %v146
    %v148 = vpop.f32.mrb[0].mxu0
    %v149 = vadd.f32 0.0, %v148
    %150 = vdwg.mxu0
    %151 = vst [vmem:[#allocation7] sm:$0xff] %v141
    %152 = vst [vmem:[#allocation7 + $0x8] sm:$0xff] %v143
    %153 = vst [vmem:[#allocation7 + $0x10] sm:$0xff] %v147
    %154 = vst [vmem:[#allocation7 + $0x18] sm:$0xff] %v149
    // Predicated region
    $region18: #{unembed.1} parent=1 // pred_check
      _
    $region19: #{unembed.1} parent=1 // pred_check_branch
      %156 = sbr.rel (0) target = $region21
    $region20: #{unembed.1} parent=1 // pred_region
      %s158 = ssub.s32 512, 512
      %159 = vsyncadd [#allocation4], %s158
      %s160 = sshll.u32 [#allocation7], 4
      %s161 = int_to_ptr.vmem [resolvable:$true] %s160
      %166 = dma.vmem_to_hbm [thread:$0]  %s161, 512, %s2, [#allocation4], 256, 256, 16
    $region21: #{unembed.1} parent=1 // pred_fallthru
      _
    // Predicated region
    $region22: #{unembed.1} parent=1 // pred_check
      _
    $region23: #{unembed.1} parent=1 // pred_check_branch
      %168 = sbr.rel (0) target = $region25
    $region24: #{unembed.1} parent=1 // pred_region
      %169 = dma.done [#allocation4], 512
    $region25: #{unembed.1} parent=1 // pred_fallthru
      _
    %170 = vsyncpa [#allocation3], 1
    %171 = vsyncpa [#allocation6], 1
    %172 = vsyncpa [#allocation4], 1

</llo_original>
